<compile_context>
chip_gen: v7x
topology: tpu7x:2x2x1
jax: 0.10.0
libtpu: 0.0.40
codegen_flags: <defaults>
</compile_context>

<pallas_src>
import jax
import jax.numpy as jnp
from jax.experimental import pallas as pl
from jax.experimental.pallas import tpu as pltpu


def mlp_kernel(x_ref, w1_ref, b1_ref, w2_ref, b2_ref, o_ref):
    # ---- Linear 1 + Tanh (MXU matmul, f32 accumulate, f32 elementwise) ----
    x = x_ref[...]                                                    # [TB, F]
    h = jnp.dot(x, w1_ref[...], preferred_element_type=jnp.float32)  # [TB, H] f32
    h = jnp.tanh(h + b1_ref[...])                                    # bias broadcast [1, H] (f32), EUP tanh
    # ---- Linear 2 (cast activations back to weight dtype for the MXU) ----
    y = jnp.dot(h.astype(w2_ref.dtype), w2_ref[...],
                preferred_element_type=jnp.float32)                  # [TB, K] f32
    y = y + b2_ref[...]                                              # bias broadcast [1, K] (f32)
    # ---- LogSoftmax over dim=1 (class axis), numerically stable, f32 ----
    m = jnp.max(y, axis=-1, keepdims=True)
    e = jnp.exp(y - m)
    lse = jnp.log(jnp.sum(e, axis=-1, keepdims=True)) + m
    o_ref[...] = (y - lse).astype(o_ref.dtype)


def _pick_tile_b(B, F, H, K, in_bytes, vmem_budget_bytes=40 * 1024 * 1024):
    """Largest batch tile (multiple of 8, <= 1024 rows) whose double-buffered
    input + output tiles, plus the VMEM-resident weights, fit the budget."""
    resident = (F * H + H + H * K + K) * 4          # weights/biases (worst case f32)
    cand = min(B, 1024)

    def tile_cost(t):
        # 2x double-buffered x tile + 2x double-buffered f32 output tile.
        return 2 * t * F * in_bytes + 2 * t * K * 4 + resident

    while cand > 8 and tile_cost(cand) > vmem_budget_bytes:
        cand //= 2
    if cand >= B:
        return B                      # whole batch in one block (block == full dim is legal)
    return max(8, (cand // 8) * 8)    # sublane-aligned tile


def mlp_forward(x, w1, b1, w2, b2, *, tile_b=None, compute_dtype=None,
                vmem_limit_bytes=48 * 1024 * 1024):
    """x: [B, F], w1: [F, H], b1: [1, H], w2: [H, K], b2: [1, K] -> [B, K] f32 log-probs."""
    B, F = x.shape
    H = w1.shape[1]
    K = w2.shape[1]

    # Optionally run the MXU operands in bf16 (v6e/v7x fast path); biases and
    # all elementwise math stay f32.
    if compute_dtype is not None:
        x = x.astype(compute_dtype)
        w1 = w1.astype(compute_dtype)
        w2 = w2.astype(compute_dtype)
    b1 = b1.astype(jnp.float32)
    b2 = b2.astype(jnp.float32)

    if tile_b is None:
        tile_b = _pick_tile_b(B, F, H, K, jnp.dtype(x.dtype).itemsize)

    grid = (pl.cdiv(B, tile_b),)

    in_bytes = jnp.dtype(x.dtype).itemsize
    cost = pl.CostEstimate(
        flops=2 * B * F * H + 2 * B * H * K,
        transcendentals=B * H + B * K,                # tanh + exp
        bytes_accessed=(B * F * in_bytes + (F * H + H * K) * in_bytes
                        + (H + K) * 4 + B * K * 4),
    )

    return pl.pallas_call(
        mlp_kernel,
        out_shape=jax.ShapeDtypeStruct((B, K), jnp.float32),
        grid=grid,
        in_specs=[
            pl.BlockSpec((tile_b, F), lambda i: (i, 0)),   # x: tiled over batch
            pl.BlockSpec((F, H), lambda i: (0, 0)),        # w1: VMEM-resident
            pl.BlockSpec((1, H), lambda i: (0, 0)),        # b1: VMEM-resident
            pl.BlockSpec((H, K), lambda i: (0, 0)),        # w2: VMEM-resident
            pl.BlockSpec((1, K), lambda i: (0, 0)),        # b2: VMEM-resident
        ],
        out_specs=pl.BlockSpec((tile_b, K), lambda i: (i, 0)),
        compiler_params=pltpu.CompilerParams(
            dimension_semantics=("parallel",),             # batch tiles independent -> both v7x TCs
            vmem_limit_bytes=vmem_limit_bytes,
        ),
        cost_estimate=cost,
    )(x, w1, b1, w2, b2)


def mlp_forward_ref(x, w1, b1, w2, b2):
    h = jnp.tanh(x @ w1 + b1)
    y = h @ w2 + b2
    return jax.nn.log_softmax(y, axis=1)


if __name__ == "__main__":
    # Shapes consistent with the module: batch_size=128 (default), num_features=32,
    # num_hiddens=32, num_kernels=8.
    B, F, H, K = 128, 32, 32, 8

    key = jax.random.PRNGKey(0)
    kx, k1, k2, k3, k4 = jax.random.split(key, 5)

    x = jax.random.normal(kx, (B, F), dtype=jnp.float32)
    # PyTorch Linear shapes are W [out, in], b [out]; we store W transposed for
    # the [in, out] matmul layout.
    w1 = jax.random.normal(k1, (F, H), dtype=jnp.float32) * 0.1
    b1 = jax.random.normal(k2, (1, H), dtype=jnp.float32) * 0.1
    w2 = jax.random.normal(k3, (H, K), dtype=jnp.float32) * 0.1
    b2 = jax.random.normal(k4, (1, K), dtype=jnp.float32) * 0.1

    ref = mlp_forward_ref(x, w1, b1, w2, b2)

    # f32 operands: tight match against the reference (single batch tile).
    out = jax.block_until_ready(mlp_forward(x, w1, b1, w2, b2))
    assert out.shape == (B, K)
    assert jnp.allclose(out, ref, atol=1e-4, rtol=1e-4), "f32 mismatch vs reference"

    # Forced small tile to exercise the multi-step batch grid path.
    out_tiled = jax.block_until_ready(mlp_forward(x, w1, b1, w2, b2, tile_b=32))
    assert out_tiled.shape == (B, K)
    assert jnp.allclose(out_tiled, ref, atol=1e-4, rtol=1e-4), "tiled mismatch vs reference"

    # bf16 MXU operands, f32 accumulate + f32 epilogue (v6e/v7x fast path).
    out_bf16 = jax.block_until_ready(
        mlp_forward(x, w1, b1, w2, b2, compute_dtype=jnp.bfloat16))
    assert out_bf16.shape == (B, K)
    assert jnp.allclose(out_bf16, ref, atol=5e-2, rtol=5e-2), "bf16 mismatch vs reference"

    print("KERNEL_OK")
</pallas_src>

<mosaic_0001>
module attributes {stable_mosaic.version = 11 : i64} {
  func.func @mlp_kernel(%arg0: i32, %arg1: memref<128x32xf32, #tpu.memory_space<vmem>>, %arg2: memref<32x32xf32, #tpu.memory_space<vmem>>, %arg3: memref<1x32xf32, #tpu.memory_space<vmem>>, %arg4: memref<32x8xf32, #tpu.memory_space<vmem>>, %arg5: memref<1x8xf32, #tpu.memory_space<vmem>>, %arg6: memref<128x8xf32, #tpu.memory_space<vmem>>) attributes {dimension_semantics = [#tpu.dimension_semantics<parallel>], iteration_bounds = array<i64: 1>, scalar_prefetch = 0 : i64, scratch_operands = 0 : i64, tpu.core_type = #tpu.core_type<tc>, window_params = [{transform_indices = @transform_0, window_bounds = array<i64: 128, 32>}, {pipeline_mode = #tpu.pipeline_mode<synchronous>, transform_indices = @transform_1, window_bounds = array<i64: 32, 32>}, {pipeline_mode = #tpu.pipeline_mode<synchronous>, transform_indices = @transform_2, window_bounds = array<i64: 1, 32>}, {pipeline_mode = #tpu.pipeline_mode<synchronous>, transform_indices = @transform_3, window_bounds = array<i64: 32, 8>}, {pipeline_mode = #tpu.pipeline_mode<synchronous>, transform_indices = @transform_4, window_bounds = array<i64: 1, 8>}, {transform_indices = @transform_5, window_bounds = array<i64: 128, 8>}]} {
    %c0 = arith.constant 0 : index
    %c0_0 = arith.constant 0 : index
    %0 = vector.load %arg1[%c0, %c0_0] : memref<128x32xf32, #tpu.memory_space<vmem>>, vector<128x32xf32>
    %c0_1 = arith.constant 0 : index
    %c0_2 = arith.constant 0 : index
    %1 = vector.load %arg2[%c0_1, %c0_2] : memref<32x32xf32, #tpu.memory_space<vmem>>, vector<32x32xf32>
    %cst = arith.constant dense<0.000000e+00> : vector<128x32xf32>
    %2 = tpu.matmul %0, %1, %cst {dimension_numbers = #tpu.dot_dimension_numbers<[1], [0], [0], [1], [0, 0, 1, 1], [], []>} : vector<128x32xf32>, vector<32x32xf32>, vector<128x32xf32> -> vector<128x32xf32>
    %c0_3 = arith.constant 0 : index
    %c0_4 = arith.constant 0 : index
    %3 = vector.load %arg3[%c0_3, %c0_4] : memref<1x32xf32, #tpu.memory_space<vmem>>, vector<1x32xf32>
    %4 = vector.broadcast %3 : vector<1x32xf32> to vector<128x32xf32>
    %5 = arith.addf %2, %4 : vector<128x32xf32>
    %6 = math.tanh %5 : vector<128x32xf32>
    %c0_5 = arith.constant 0 : index
    %c0_6 = arith.constant 0 : index
    %7 = vector.load %arg4[%c0_5, %c0_6] : memref<32x8xf32, #tpu.memory_space<vmem>>, vector<32x8xf32>
    %cst_7 = arith.constant dense<0.000000e+00> : vector<128x8xf32>
    %8 = tpu.matmul %6, %7, %cst_7 {dimension_numbers = #tpu.dot_dimension_numbers<[1], [0], [0], [1], [0, 0, 1, 1], [], []>} : vector<128x32xf32>, vector<32x8xf32>, vector<128x8xf32> -> vector<128x8xf32>
    %c0_8 = arith.constant 0 : index
    %c0_9 = arith.constant 0 : index
    %9 = vector.load %arg5[%c0_8, %c0_9] : memref<1x8xf32, #tpu.memory_space<vmem>>, vector<1x8xf32>
    %10 = vector.broadcast %9 : vector<1x8xf32> to vector<128x8xf32>
    %11 = arith.addf %8, %10 : vector<128x8xf32>
    %cst_10 = arith.constant dense<0xFF800000> : vector<128xf32>
    %12 = vector.multi_reduction <maximumf>, %11, %cst_10 [1] : vector<128x8xf32> to vector<128xf32>
    %13 = vector.shape_cast %12 : vector<128xf32> to vector<128x1xf32>
    %14 = vector.broadcast %13 : vector<128x1xf32> to vector<128x8xf32>
    %15 = arith.subf %11, %14 : vector<128x8xf32>
    %16 = math.exp %15 : vector<128x8xf32>
    %cst_11 = arith.constant dense<0.000000e+00> : vector<128xf32>
    %17 = vector.multi_reduction <add>, %16, %cst_11 [1] : vector<128x8xf32> to vector<128xf32>
    %18 = vector.shape_cast %17 : vector<128xf32> to vector<128x1xf32>
    %19 = math.log %18 : vector<128x1xf32>
    %20 = arith.addf %19, %13 : vector<128x1xf32>
    %21 = vector.broadcast %20 : vector<128x1xf32> to vector<128x8xf32>
    %22 = arith.subf %11, %21 : vector<128x8xf32>
    %c0_12 = arith.constant 0 : index
    %c0_13 = arith.constant 0 : index
    %23 = vector.load %arg6[%c0_12, %c0_13] : memref<128x8xf32, #tpu.memory_space<vmem>>, vector<128x8xf32>
    tpu.vector_store %arg6[%c0_12, %c0_13], %22 {strides = array<i32>} : memref<128x8xf32, #tpu.memory_space<vmem>>, vector<128x8xf32>,
    return
  }
  func.func @transform_0(%arg0: i32) -> (i32, i32) {
    %c0_i32 = arith.constant 0 : i32
    %c0_i32_0 = arith.constant 0 : i32
    return %arg0, %c0_i32 : i32, i32
  }
  func.func @transform_1(%arg0: i32) -> (i32, i32) {
    %c0_i32 = arith.constant 0 : i32
    %c0_i32_0 = arith.constant 0 : i32
    %c0_i32_1 = arith.constant 0 : i32
    return %c0_i32, %c0_i32_0 : i32, i32
  }
  func.func @transform_2(%arg0: i32) -> (i32, i32) {
    %c0_i32 = arith.constant 0 : i32
    %c0_i32_0 = arith.constant 0 : i32
    %c0_i32_1 = arith.constant 0 : i32
    return %c0_i32, %c0_i32_0 : i32, i32
  }
  func.func @transform_3(%arg0: i32) -> (i32, i32) {
    %c0_i32 = arith.constant 0 : i32
    %c0_i32_0 = arith.constant 0 : i32
    %c0_i32_1 = arith.constant 0 : i32
    return %c0_i32, %c0_i32_0 : i32, i32
  }
  func.func @transform_4(%arg0: i32) -> (i32, i32) {
    %c0_i32 = arith.constant 0 : i32
    %c0_i32_0 = arith.constant 0 : i32
    %c0_i32_1 = arith.constant 0 : i32
    return %c0_i32, %c0_i32_0 : i32, i32
  }
  func.func @transform_5(%arg0: i32) -> (i32, i32) {
    %c0_i32 = arith.constant 0 : i32
    %c0_i32_0 = arith.constant 0 : i32
    return %arg0, %c0_i32 : i32, i32
  }
}

</mosaic_0001>

<llo_original>
// kernel: tpu_custom_call.1
$region0: #{tpu_custom_call.1}
  #allocation0 [shape = 'u32[]', space=smem, size = 0x4, offset = 0x4, fixed_abs, tag = 'smem constant byte address 0x4 - core index']
  #allocation1 [shape = 'u32[144,128]{1,0:T(1,128)}', space=vmem, size = 0x12000, scoped, tag = 'internal scratch']
  %s0 = inlined_call_operand.vmem [shape: f32[128,32], index: 0, kind: input, shape index: {}]
  %s1 = inlined_call_operand.vmem [shape: f32[32,32], index: 1, kind: input, shape index: {}]
  %s2 = inlined_call_operand.vmem [shape: f32[1,32], index: 2, kind: input, shape index: {}]
  %s3 = inlined_call_operand.vmem [shape: f32[32,8], index: 3, kind: input, shape index: {}]
  %s4 = inlined_call_operand.vmem [shape: f32[1,8], index: 4, kind: input, shape index: {}]
  %s5 = inlined_call_operand.vmem [shape: f32[128,8], index: 5, kind: output, shape index: {}]
  %s6 = sld [smem:[#allocation0]]
  $region30: #{tpu_custom_call.1} parent=0
    _
  %s8 = ssub.s32 1, %s6
  %s9 = scalar_select 0, %s8, %s6
  // Predicated region
  $region2: #{tpu_custom_call.1} parent=0 // pred_check
    _
  $region3: #{tpu_custom_call.1} parent=0 // pred_check_branch
    %11 = sbr.rel (0) target = $region5
  $region4: #{tpu_custom_call.1} parent=0 // pred_region
    _
  $region5: #{tpu_custom_call.1} parent=0 // pred_fallthru
    _
  // Predicated region
  $region6: #{tpu_custom_call.1} parent=0 // pred_check
    _
  $region7: #{tpu_custom_call.1} parent=0 // pred_check_branch
    %13 = sbr.rel (0) target = $region9
  $region8: #{tpu_custom_call.1} parent=0 // pred_region
    _
  $region9: #{tpu_custom_call.1} parent=0 // pred_fallthru
    _
  // Predicated region
  $region10: #{tpu_custom_call.1} parent=0 // pred_check
    _
  $region11: #{tpu_custom_call.1} parent=0 // pred_check_branch
    %15 = sbr.rel (0) target = $region13
  $region12: #{tpu_custom_call.1} parent=0 // pred_region
    _
  $region13: #{tpu_custom_call.1} parent=0 // pred_fallthru
    _
  // Predicated region
  $region14: #{tpu_custom_call.1} parent=0 // pred_check
    _
  $region15: #{tpu_custom_call.1} parent=0 // pred_check_branch
    %17 = sbr.rel (0) target = $region17
  $region16: #{tpu_custom_call.1} parent=0 // pred_region
    _
  $region17: #{tpu_custom_call.1} parent=0 // pred_fallthru
    _
  // Predicated region
  $region18: #{tpu_custom_call.1} parent=0 // pred_check
    _
  $region19: #{tpu_custom_call.1} parent=0 // pred_check_branch
    %19 = sbr.rel (0) target = $region21
  $region20: #{tpu_custom_call.1} parent=0 // pred_region
    _
  $region21: #{tpu_custom_call.1} parent=0 // pred_fallthru
    _
  %v20 = vld [vmem:[%s0] sm:$0xff]
  %v21 = vld [vmem:[%s0 + $0x8] sm:$0xff]
  %v22 = vld [vmem:[%s0 + $0x10] sm:$0xff]
  %v23 = vld [vmem:[%s0 + $0x18] sm:$0xff]
  %v24 = vld [vmem:[%s0 + $0x20] sm:$0xff]
  %v25 = vld [vmem:[%s0 + $0x28] sm:$0xff]
  %v26 = vld [vmem:[%s0 + $0x30] sm:$0xff]
  %v27 = vld [vmem:[%s0 + $0x38] sm:$0xff]
  %v28 = vld [vmem:[%s0 + $0x40] sm:$0xff]
  %v29 = vld [vmem:[%s0 + $0x48] sm:$0xff]
  %v30 = vld [vmem:[%s0 + $0x50] sm:$0xff]
  %v31 = vld [vmem:[%s0 + $0x58] sm:$0xff]
  %v32 = vld [vmem:[%s0 + $0x60] sm:$0xff]
  %v33 = vld [vmem:[%s0 + $0x68] sm:$0xff]
  %v34 = vld [vmem:[%s0 + $0x70] sm:$0xff]
  %v35 = vld [vmem:[%s0 + $0x78] sm:$0xff]
  %v36 = vld [vmem:[%s1] sm:$0xff]
  %v37 = vld [vmem:[%s1 + $0x8] sm:$0xff]
  %v38 = vld [vmem:[%s1 + $0x10] sm:$0xff]
  %v39 = vld [vmem:[%s1 + $0x18] sm:$0xff]
  %v40 = vld [vmem:[%s2] sm:$0x1]
  %v42 = vlaneseq
  %v43 = vshrl.u32 %v42, 7
  %v44 = vsub.s32 0, %v43
  %v45 = vrot.slane %v40, %v44
  %vm47 = vcmask 261120
  %v49 = vsel %vm47, %v20, 0
  %v52 = vsel %vm47, %v21, 0
  %v55 = vsel %vm47, %v22, 0
  %v58 = vsel %vm47, %v23, 0
  %v61 = vsel %vm47, %v24, 0
  %v64 = vsel %vm47, %v25, 0
  %v67 = vsel %vm47, %v26, 0
  %v70 = vsel %vm47, %v27, 0
  %v73 = vsel %vm47, %v28, 0
  %v76 = vsel %vm47, %v29, 0
  %v79 = vsel %vm47, %v30, 0
  %v82 = vsel %vm47, %v31, 0
  %v85 = vsel %vm47, %v32, 0
  %v88 = vsel %vm47, %v33, 0
  %v91 = vsel %vm47, %v34, 0
  %v94 = vsel %vm47, %v35, 0
  %96 = vmatprep.subr.mxu0 0.0
  %97 = vmatpush1.msra.mxu0 %v36
  %98 = vmatprep.subr.mxu0 0.0
  %99 = vmatpush1.msra.mxu0 %v37
  %100 = vmatprep.subr.mxu0 0.0
  %101 = vmatpush1.msra.mxu0 %v38
  %102 = vmatprep.subr.mxu0 0.0
  %103 = vmatpush1.msra.mxu0 %v39
  %104 = vmatprep.subr.mxu0 0.0
  %105 = vmatpush1.msra.mxu0 0.0
  %106 = vmatprep.subr.mxu0 0.0
  %107 = vmatpush1.msra.mxu0 0.0
  %108 = vmatprep.subr.mxu0 0.0
  %109 = vmatpush1.msra.mxu0 0.0
  %110 = vmatprep.subr.mxu0 0.0
  %111 = vmatpush1.msra.mxu0 0.0
  %112 = vmatprep.subr.mxu0 0.0
  %113 = vmatpush1.msra.mxu0 0.0
  %114 = vmatprep.subr.mxu0 0.0
  %115 = vmatpush1.msra.mxu0 0.0
  %116 = vmatprep.subr.mxu0 0.0
  %117 = vmatpush1.msra.mxu0 0.0
  %118 = vmatprep.subr.mxu0 0.0
  %119 = vmatpush1.msra.mxu0 0.0
  %120 = vmatprep.subr.mxu0 0.0
  %121 = vmatpush1.msra.mxu0 0.0
  %122 = vmatprep.subr.mxu0 0.0
  %123 = vmatpush1.msra.mxu0 0.0
  %124 = vmatprep.subr.mxu0 0.0
  %125 = vmatpush1.msra.mxu0 0.0
  %126 = vmatprep.subr.mxu0 0.0
  %127 = vmatpush1.msra.mxu0 0.0
  %128 = vmatprep.subr.mxu0 0.0
  %129 = vmatpush1.msra.mxu0 0.0
  %130 = vmatprep.subr.mxu0 0.0
  %131 = vmatpush1.msra.mxu0 0.0
  %132 = vmatprep.subr.mxu0 0.0
  %133 = vmatpush1.msra.mxu0 0.0
  %134 = vmatprep.subr.mxu0 0.0
  %135 = vmatpush1.msra.mxu0 0.0
  %136 = vmatprep.subr.mxu0 0.0
  %137 = vmatpush1.msra.mxu0 0.0
  %138 = vmatprep.subr.mxu0 0.0
  %139 = vmatpush1.msra.mxu0 0.0
  %140 = vmatprep.subr.mxu0 0.0
  %141 = vmatpush1.msra.mxu0 0.0
  %142 = vmatprep.subr.mxu0 0.0
  %143 = vmatpush1.msra.mxu0 0.0
  %144 = vmatprep.subr.mxu0 0.0
  %145 = vmatpush1.msra.mxu0 0.0
  %146 = vmatprep.subr.mxu0 0.0
  %147 = vmatpush1.msra.mxu0 0.0
  %148 = vmatprep.subr.mxu0 0.0
  %149 = vmatpush1.msra.mxu0 0.0
  %150 = vmatprep.subr.mxu0 0.0
  %151 = vmatpush1.msra.mxu0 0.0
  %152 = vmatprep.subr.mxu0 0.0
  %153 = vmatpush1.msra.mxu0 0.0
  %154 = vmatprep.subr.mxu0 0.0
  %155 = vmatpush1.msra.mxu0 0.0
  %156 = vmatprep.subr.mxu0 0.0
  %157 = vmatpush1.msra.mxu0 0.0
  %158 = vmatprep.subr.mxu0 0.0
  %159 = vmatpush1.msra.mxu0 0.0
  %160 = vmatprep.mubr.f32.mxu0 0.0
  %161 = vmatmul.mubr.f32.gmra.mrb[0].mxu0 %v49
  %v162 = vpop.f32.mrb[0].mxu0
  %v163 = vadd.f32 %v45, %v162
  %v164 = vpop.f32.mrb[0].mxu0
  %165 = vmatprep.mubr.f32.mxu0 0.0
  %166 = vmatmul.mubr.f32.gmra.mrb[0].mxu0 %v52
  %v167 = vpop.f32.mrb[0].mxu0
  %v168 = vadd.f32 %v45, %v167
  %v169 = vpop.f32.mrb[0].mxu0
  %170 = vmatprep.mubr.f32.mxu0 0.0
  %171 = vmatmul.mubr.f32.gmra.mrb[0].mxu0 %v55
  %v172 = vpop.f32.mrb[0].mxu0
  %v173 = vadd.f32 %v45, %v172
  %v174 = vpop.f32.mrb[0].mxu0
  %175 = vmatprep.mubr.f32.mxu0 0.0
  %176 = vmatmul.mubr.f32.gmra.mrb[0].mxu0 %v58
  %v177 = vpop.f32.mrb[0].mxu0
  %v178 = vadd.f32 %v45, %v177
  %v179 = vpop.f32.mrb[0].mxu0
  %180 = vmatprep.mubr.f32.mxu0 0.0
  %181 = vmatmul.mubr.f32.gmra.mrb[0].mxu0 %v61
  %v182 = vpop.f32.mrb[0].mxu0
  %v183 = vadd.f32 %v45, %v182
  %v184 = vpop.f32.mrb[0].mxu0
  %185 = vmatprep.mubr.f32.mxu0 0.0
  %186 = vmatmul.mubr.f32.gmra.mrb[0].mxu0 %v64
  %v187 = vpop.f32.mrb[0].mxu0
  %v188 = vadd.f32 %v45, %v187
  %v189 = vpop.f32.mrb[0].mxu0
  %190 = vmatprep.mubr.f32.mxu0 0.0
  %191 = vmatmul.mubr.f32.gmra.mrb[0].mxu0 %v67
  %v192 = vpop.f32.mrb[0].mxu0
  %v193 = vadd.f32 %v45, %v192
  %v194 = vpop.f32.mrb[0].mxu0
  %195 = vmatprep.mubr.f32.mxu0 0.0
  %196 = vmatmul.mubr.f32.gmra.mrb[0].mxu0 %v70
  %v197 = vpop.f32.mrb[0].mxu0
  %v198 = vadd.f32 %v45, %v197
  %v199 = vpop.f32.mrb[0].mxu0
  %200 = vmatprep.mubr.f32.mxu0 0.0
  %201 = vmatmul.mubr.f32.gmra.mrb[0].mxu0 %v73
  %v202 = vpop.f32.mrb[0].mxu0
  %v203 = vadd.f32 %v45, %v202
  %v204 = vpop.f32.mrb[0].mxu0
  %205 = vmatprep.mubr.f32.mxu0 0.0
  %206 = vmatmul.mubr.f32.gmra.mrb[0].mxu0 %v76
  %v207 = vpop.f32.mrb[0].mxu0
  %v208 = vadd.f32 %v45, %v207
  %v209 = vpop.f32.mrb[0].mxu0
  %210 = vmatprep.mubr.f32.mxu0 0.0
  %211 = vmatmul.mubr.f32.gmra.mrb[0].mxu0 %v79
  %v212 = vpop.f32.mrb[0].mxu0
  %v213 = vadd.f32 %v45, %v212
  %v214 = vpop.f32.mrb[0].mxu0
  %215 = vmatprep.mubr.f32.mxu0 0.0
  %216 = vmatmul.mubr.f32.gmra.mrb[0].mxu0 %v82
  %v217 = vpop.f32.mrb[0].mxu0
  %v218 = vadd.f32 %v45, %v217
  %v219 = vpop.f32.mrb[0].mxu0
  %220 = vmatprep.mubr.f32.mxu0 0.0
  %221 = vmatmul.mubr.f32.gmra.mrb[0].mxu0 %v85
  %v222 = vpop.f32.mrb[0].mxu0
  %v223 = vadd.f32 %v45, %v222
  %v224 = vpop.f32.mrb[0].mxu0
  %225 = vmatprep.mubr.f32.mxu0 0.0
  %226 = vmatmul.mubr.f32.gmra.mrb[0].mxu0 %v88
  %v227 = vpop.f32.mrb[0].mxu0
  %v228 = vadd.f32 %v45, %v227
  %v229 = vpop.f32.mrb[0].mxu0
  %230 = vmatprep.mubr.f32.mxu0 0.0
  %231 = vmatmul.mubr.f32.gmra.mrb[0].mxu0 %v91
  %v232 = vpop.f32.mrb[0].mxu0
  %v233 = vadd.f32 %v45, %v232
  %v234 = vpop.f32.mrb[0].mxu0
  %235 = vmatprep.mubr.f32.mxu0 0.0
  %236 = vmatmul.mubr.f32.gmra.mrb[0].mxu0 %v94
  %v237 = vpop.f32.mrb[0].mxu0
  %v238 = vadd.f32 %v45, %v237
  %v239 = vpop.f32.mrb[0].mxu0
  %240 = vdwg.mxu0
  %v241 = vtanh.pop %v163
  %v242 = vtanh.pop %v168
  %v243 = vtanh.pop %v173
  %v244 = vtanh.pop %v178
  %v245 = vtanh.pop %v183
  %v246 = vtanh.pop %v188
  %v247 = vtanh.pop %v193
  %v248 = vtanh.pop %v198
  %v249 = vtanh.pop %v203
  %v250 = vtanh.pop %v208
  %v251 = vtanh.pop %v213
  %v252 = vtanh.pop %v218
  %v253 = vtanh.pop %v223
  %v254 = vtanh.pop %v228
  %v255 = vtanh.pop %v233
  %v256 = vtanh.pop %v238
  %v257 = vld [vmem:[%s3] sm:$0xff]
  %v258 = vld [vmem:[%s3 + $0x8] sm:$0xff]
  %v259 = vld [vmem:[%s3 + $0x10] sm:$0xff]
  %v260 = vld [vmem:[%s3 + $0x18] sm:$0xff]
  %v261 = vld [vmem:[%s4] sm:$0x1]
  %v263 = vlaneseq
  %v264 = vshrl.u32 %v263, 7
  %v265 = vsub.s32 0, %v264
  %v266 = vrot.slane %v261, %v265
  %v269 = vsel %vm47, %v241, 0
  %v272 = vsel %vm47, %v242, 0
  %v275 = vsel %vm47, %v243, 0
  %v278 = vsel %vm47, %v244, 0
  %v281 = vsel %vm47, %v245, 0
  %v284 = vsel %vm47, %v246, 0
  %v287 = vsel %vm47, %v247, 0
  %v290 = vsel %vm47, %v248, 0
  %v293 = vsel %vm47, %v249, 0
  %v296 = vsel %vm47, %v250, 0
  %v299 = vsel %vm47, %v251, 0
  %v302 = vsel %vm47, %v252, 0
  %v305 = vsel %vm47, %v253, 0
  %v308 = vsel %vm47, %v254, 0
  %v311 = vsel %vm47, %v255, 0
  %v314 = vsel %vm47, %v256, 0
  %316 = vmatprep.subr.mxu0 0.0
  %317 = vmatpush1.msra.mxu0 %v257
  %318 = vmatprep.subr.mxu0 0.0
  %319 = vmatpush1.msra.mxu0 %v258
  %320 = vmatprep.subr.mxu0 0.0
  %321 = vmatpush1.msra.mxu0 %v259
  %322 = vmatprep.subr.mxu0 0.0
  %323 = vmatpush1.msra.mxu0 %v260
  %324 = vmatprep.subr.mxu0 0.0
  %325 = vmatpush1.msra.mxu0 0.0
  %326 = vmatprep.subr.mxu0 0.0
  %327 = vmatpush1.msra.mxu0 0.0
  %328 = vmatprep.subr.mxu0 0.0
  %329 = vmatpush1.msra.mxu0 0.0
  %330 = vmatprep.subr.mxu0 0.0
  %331 = vmatpush1.msra.mxu0 0.0
  %332 = vmatprep.subr.mxu0 0.0
  %333 = vmatpush1.msra.mxu0 0.0
  %334 = vmatprep.subr.mxu0 0.0
  %335 = vmatpush1.msra.mxu0 0.0
  %336 = vmatprep.subr.mxu0 0.0
  %337 = vmatpush1.msra.mxu0 0.0
  %338 = vmatprep.subr.mxu0 0.0
  %339 = vmatpush1.msra.mxu0 0.0
  %340 = vmatprep.subr.mxu0 0.0
  %341 = vmatpush1.msra.mxu0 0.0
  %342 = vmatprep.subr.mxu0 0.0
  %343 = vmatpush1.msra.mxu0 0.0
  %344 = vmatprep.subr.mxu0 0.0
  %345 = vmatpush1.msra.mxu0 0.0
  %346 = vmatprep.subr.mxu0 0.0
  %347 = vmatpush1.msra.mxu0 0.0
  %348 = vmatprep.subr.mxu0 0.0
  %349 = vmatpush1.msra.mxu0 0.0
  %350 = vmatprep.subr.mxu0 0.0
  %351 = vmatpush1.msra.mxu0 0.0
  %352 = vmatprep.subr.mxu0 0.0
  %353 = vmatpush1.msra.mxu0 0.0
  %354 = vmatprep.subr.mxu0 0.0
  %355 = vmatpush1.msra.mxu0 0.0
  %356 = vmatprep.subr.mxu0 0.0
  %357 = vmatpush1.msra.mxu0 0.0
  %358 = vmatprep.subr.mxu0 0.0
  %359 = vmatpush1.msra.mxu0 0.0
  %360 = vmatprep.subr.mxu0 0.0
  %361 = vmatpush1.msra.mxu0 0.0
  %362 = vmatprep.subr.mxu0 0.0
  %363 = vmatpush1.msra.mxu0 0.0
  %364 = vmatprep.subr.mxu0 0.0
  %365 = vmatpush1.msra.mxu0 0.0
  %366 = vmatprep.subr.mxu0 0.0
  %367 = vmatpush1.msra.mxu0 0.0
  %368 = vmatprep.subr.mxu0 0.0
  %369 = vmatpush1.msra.mxu0 0.0
  %370 = vmatprep.subr.mxu0 0.0
  %371 = vmatpush1.msra.mxu0 0.0
  %372 = vmatprep.subr.mxu0 0.0
  %373 = vmatpush1.msra.mxu0 0.0
  %374 = vmatprep.subr.mxu0 0.0
  %375 = vmatpush1.msra.mxu0 0.0
  %376 = vmatprep.subr.mxu0 0.0
  %377 = vmatpush1.msra.mxu0 0.0
  %378 = vmatprep.subr.mxu0 0.0
  %379 = vmatpush1.msra.mxu0 0.0
  %380 = vmatprep.mubr.f32.mxu0 0.0
  %381 = vmatmul.mubr.f32.gmra.mrb[0].mxu0 %v269
  %v382 = vpop.f32.mrb[0].mxu0
  %v383 = vadd.f32 %v266, %v382
  %v384 = vpop.f32.mrb[0].mxu0
  %385 = vmatprep.mubr.f32.mxu0 0.0
  %386 = vmatmul.mubr.f32.gmra.mrb[0].mxu0 %v272
  %v387 = vpop.f32.mrb[0].mxu0
  %v388 = vadd.f32 %v266, %v387
  %v389 = vpop.f32.mrb[0].mxu0
  %390 = vmatprep.mubr.f32.mxu0 0.0
  %391 = vmatmul.mubr.f32.gmra.mrb[0].mxu0 %v275
  %v392 = vpop.f32.mrb[0].mxu0
  %v393 = vadd.f32 %v266, %v392
  %v394 = vpop.f32.mrb[0].mxu0
  %395 = vmatprep.mubr.f32.mxu0 0.0
  %396 = vmatmul.mubr.f32.gmra.mrb[0].mxu0 %v278
  %v397 = vpop.f32.mrb[0].mxu0
  %v398 = vadd.f32 %v266, %v397
  %v399 = vpop.f32.mrb[0].mxu0
  %400 = vmatprep.mubr.f32.mxu0 0.0
  %401 = vmatmul.mubr.f32.gmra.mrb[0].mxu0 %v281
  %v402 = vpop.f32.mrb[0].mxu0
  %v403 = vadd.f32 %v266, %v402
  %v404 = vpop.f32.mrb[0].mxu0
  %405 = vmatprep.mubr.f32.mxu0 0.0
  %406 = vmatmul.mubr.f32.gmra.mrb[0].mxu0 %v284
  %v407 = vpop.f32.mrb[0].mxu0
  %v408 = vadd.f32 %v266, %v407
  %v409 = vpop.f32.mrb[0].mxu0
  %410 = vmatprep.mubr.f32.mxu0 0.0
  %411 = vmatmul.mubr.f32.gmra.mrb[0].mxu0 %v287
  %v412 = vpop.f32.mrb[0].mxu0
  %v413 = vadd.f32 %v266, %v412
  %v414 = vpop.f32.mrb[0].mxu0
  %415 = vmatprep.mubr.f32.mxu0 0.0
  %416 = vmatmul.mubr.f32.gmra.mrb[0].mxu0 %v290
  %v417 = vpop.f32.mrb[0].mxu0
  %v418 = vadd.f32 %v266, %v417
  %v419 = vpop.f32.mrb[0].mxu0
  %420 = vmatprep.mubr.f32.mxu0 0.0
  %421 = vmatmul.mubr.f32.gmra.mrb[0].mxu0 %v293
  %v422 = vpop.f32.mrb[0].mxu0
  %v423 = vadd.f32 %v266, %v422
  %v424 = vpop.f32.mrb[0].mxu0
  %425 = vmatprep.mubr.f32.mxu0 0.0
  %426 = vmatmul.mubr.f32.gmra.mrb[0].mxu0 %v296
  %v427 = vpop.f32.mrb[0].mxu0
  %v428 = vadd.f32 %v266, %v427
  %v429 = vpop.f32.mrb[0].mxu0
  %430 = vmatprep.mubr.f32.mxu0 0.0
  %431 = vmatmul.mubr.f32.gmra.mrb[0].mxu0 %v299
  %v432 = vpop.f32.mrb[0].mxu0
  %v433 = vadd.f32 %v266, %v432
  %v434 = vpop.f32.mrb[0].mxu0
  %435 = vmatprep.mubr.f32.mxu0 0.0
  %436 = vmatmul.mubr.f32.gmra.mrb[0].mxu0 %v302
  %v437 = vpop.f32.mrb[0].mxu0
  %v438 = vadd.f32 %v266, %v437
  %v439 = vpop.f32.mrb[0].mxu0
  %440 = vmatprep.mubr.f32.mxu0 0.0
  %441 = vmatmul.mubr.f32.gmra.mrb[0].mxu0 %v305
  %v442 = vpop.f32.mrb[0].mxu0
  %v443 = vadd.f32 %v266, %v442
  %v444 = vpop.f32.mrb[0].mxu0
  %445 = vmatprep.mubr.f32.mxu0 0.0
  %446 = vmatmul.mubr.f32.gmra.mrb[0].mxu0 %v308
  %v447 = vpop.f32.mrb[0].mxu0
  %v448 = vadd.f32 %v266, %v447
  %v449 = vpop.f32.mrb[0].mxu0
  %450 = vmatprep.mubr.f32.mxu0 0.0
  %451 = vmatmul.mubr.f32.gmra.mrb[0].mxu0 %v311
  %v452 = vpop.f32.mrb[0].mxu0
  %v453 = vadd.f32 %v266, %v452
  %v454 = vpop.f32.mrb[0].mxu0
  %455 = vmatprep.mubr.f32.mxu0 0.0
  %456 = vmatmul.mubr.f32.gmra.mrb[0].mxu0 %v314
  %v457 = vpop.f32.mrb[0].mxu0
  %v458 = vadd.f32 %v266, %v457
  %v459 = vpop.f32.mrb[0].mxu0
  %460 = vdwg.mxu0
  %vm461 = vcmask 64512
  %v462 = vsel %vm461, %v383, -inf
  %463 = vmax.xlane.f32.xlu0 %v462
  %v464 = vpop.xlane.xlu0 %463
  %v465 = vsel %vm461, %v388, -inf
  %466 = vmax.xlane.f32.xlu0 %v465
  %v467 = vpop.xlane.xlu0 %466
  %v468 = vsel %vm461, %v393, -inf
  %469 = vmax.xlane.f32.xlu0 %v468
  %v470 = vpop.xlane.xlu0 %469
  %v471 = vsel %vm461, %v398, -inf
  %472 = vmax.xlane.f32.xlu0 %v471
  %v473 = vpop.xlane.xlu0 %472
  %v474 = vsel %vm461, %v403, -inf
  %475 = vmax.xlane.f32.xlu0 %v474
  %v476 = vpop.xlane.xlu0 %475
  %v477 = vsel %vm461, %v408, -inf
  %478 = vmax.xlane.f32.xlu0 %v477
  %v479 = vpop.xlane.xlu0 %478
  %v480 = vsel %vm461, %v413, -inf
  %481 = vmax.xlane.f32.xlu0 %v480
  %v482 = vpop.xlane.xlu0 %481
  %v483 = vsel %vm461, %v418, -inf
  %484 = vmax.xlane.f32.xlu0 %v483
  %v485 = vpop.xlane.xlu0 %484
  %v486 = vsel %vm461, %v423, -inf
  %487 = vmax.xlane.f32.xlu0 %v486
  %v488 = vpop.xlane.xlu0 %487
  %v489 = vsel %vm461, %v428, -inf
  %490 = vmax.xlane.f32.xlu0 %v489
  %v491 = vpop.xlane.xlu0 %490
  %v492 = vsel %vm461, %v433, -inf
  %493 = vmax.xlane.f32.xlu0 %v492
  %v494 = vpop.xlane.xlu0 %493
  %v495 = vsel %vm461, %v438, -inf
  %496 = vmax.xlane.f32.xlu0 %v495
  %v497 = vpop.xlane.xlu0 %496
  %v498 = vsel %vm461, %v443, -inf
  %499 = vmax.xlane.f32.xlu0 %v498
  %v500 = vpop.xlane.xlu0 %499
  %v501 = vsel %vm461, %v448, -inf
  %502 = vmax.xlane.f32.xlu0 %v501
  %v503 = vpop.xlane.xlu0 %502
  %v504 = vsel %vm461, %v453, -inf
  %505 = vmax.xlane.f32.xlu0 %v504
  %v506 = vpop.xlane.xlu0 %505
  %v507 = vsel %vm461, %v458, -inf
  %508 = vmax.xlane.f32.xlu0 %v507
  %v509 = vpop.xlane.xlu0 %508
  %v510 = vsub.f32 %v383, %v464
  %v511 = vsub.f32 %v388, %v467
  %v512 = vsub.f32 %v393, %v470
  %v513 = vsub.f32 %v398, %v473
  %v514 = vsub.f32 %v403, %v476
  %v515 = vsub.f32 %v408, %v479
  %v516 = vsub.f32 %v413, %v482
  %v517 = vsub.f32 %v418, %v485
  %v518 = vsub.f32 %v423, %v488
  %v519 = vsub.f32 %v428, %v491
  %v520 = vsub.f32 %v433, %v494
  %v521 = vsub.f32 %v438, %v497
  %v522 = vsub.f32 %v443, %v500
  %v523 = vsub.f32 %v448, %v503
  %v524 = vsub.f32 %v453, %v506
  %v525 = vsub.f32 %v458, %v509
  %v526 = vmul.f32 %v510, 1.442695
  %v527 = vpow.pop %v526
  %v528 = vmul.f32 %v511, 1.442695
  %v529 = vpow.pop %v528
  %v530 = vmul.f32 %v512, 1.442695
  %v531 = vpow.pop %v530
  %v532 = vmul.f32 %v513, 1.442695
  %v533 = vpow.pop %v532
  %v534 = vmul.f32 %v514, 1.442695
  %v535 = vpow.pop %v534
  %v536 = vmul.f32 %v515, 1.442695
  %v537 = vpow.pop %v536
  %v538 = vmul.f32 %v516, 1.442695
  %v539 = vpow.pop %v538
  %v540 = vmul.f32 %v517, 1.442695
  %v541 = vpow.pop %v540
  %v542 = vmul.f32 %v518, 1.442695
  %v543 = vpow.pop %v542
  %v544 = vmul.f32 %v519, 1.442695
  %v545 = vpow.pop %v544
  %v546 = vmul.f32 %v520, 1.442695
  %v547 = vpow.pop %v546
  %v548 = vmul.f32 %v521, 1.442695
  %v549 = vpow.pop %v548
  %v550 = vmul.f32 %v522, 1.442695
  %v551 = vpow.pop %v550
  %v552 = vmul.f32 %v523, 1.442695
  %v553 = vpow.pop %v552
  %v554 = vmul.f32 %v524, 1.442695
  %v555 = vpow.pop %v554
  %v556 = vmul.f32 %v525, 1.442695
  %v557 = vpow.pop %v556
  %v558 = vsel %vm461, %v527, 0.0
  %559 = vadd.xlane.f32.xlu0 %v558
  %v560 = vpop.xlane.xlu0 %559
  %v561 = vsel %vm461, %v529, 0.0
  %562 = vadd.xlane.f32.xlu0 %v561
  %v563 = vpop.xlane.xlu0 %562
  %v564 = vsel %vm461, %v531, 0.0
  %565 = vadd.xlane.f32.xlu0 %v564
  %v566 = vpop.xlane.xlu0 %565
  %v567 = vsel %vm461, %v533, 0.0
  %568 = vadd.xlane.f32.xlu0 %v567
  %v569 = vpop.xlane.xlu0 %568
  %v570 = vsel %vm461, %v535, 0.0
  %571 = vadd.xlane.f32.xlu0 %v570
  %v572 = vpop.xlane.xlu0 %571
  %v573 = vsel %vm461, %v537, 0.0
  %574 = vadd.xlane.f32.xlu0 %v573
  %v575 = vpop.xlane.xlu0 %574
  %v576 = vsel %vm461, %v539, 0.0
  %577 = vadd.xlane.f32.xlu0 %v576
  %v578 = vpop.xlane.xlu0 %577
  %v579 = vsel %vm461, %v541, 0.0
  %580 = vadd.xlane.f32.xlu0 %v579
  %v581 = vpop.xlane.xlu0 %580
  %v582 = vsel %vm461, %v543, 0.0
  %583 = vadd.xlane.f32.xlu0 %v582
  %v584 = vpop.xlane.xlu0 %583
  %v585 = vsel %vm461, %v545, 0.0
  %586 = vadd.xlane.f32.xlu0 %v585
  %v587 = vpop.xlane.xlu0 %586
  %v588 = vsel %vm461, %v547, 0.0
  %589 = vadd.xlane.f32.xlu0 %v588
  %v590 = vpop.xlane.xlu0 %589
  %v591 = vsel %vm461, %v549, 0.0
  %592 = vadd.xlane.f32.xlu0 %v591
  %v593 = vpop.xlane.xlu0 %592
  %v594 = vsel %vm461, %v551, 0.0
  %595 = vadd.xlane.f32.xlu0 %v594
  %v596 = vpop.xlane.xlu0 %595
  %v597 = vsel %vm461, %v553, 0.0
  %598 = vadd.xlane.f32.xlu0 %v597
  %v599 = vpop.xlane.xlu0 %598
  %v600 = vsel %vm461, %v555, 0.0
  %601 = vadd.xlane.f32.xlu0 %v600
  %v602 = vpop.xlane.xlu0 %601
  %v603 = vsel %vm461, %v557, 0.0
  %604 = vadd.xlane.f32.xlu0 %v603
  %v605 = vpop.xlane.xlu0 %604
  %v606 = vlog2.pop %v560
  %v607 = vmul.f32 %v606, 0.6931472
  %v608 = vlog2.pop %v563
  %v609 = vmul.f32 %v608, 0.6931472
  %v610 = vlog2.pop %v566
  %v611 = vmul.f32 %v610, 0.6931472
  %v612 = vlog2.pop %v569
  %v613 = vmul.f32 %v612, 0.6931472
  %v614 = vlog2.pop %v572
  %v615 = vmul.f32 %v614, 0.6931472
  %v616 = vlog2.pop %v575
  %v617 = vmul.f32 %v616, 0.6931472
  %v618 = vlog2.pop %v578
  %v619 = vmul.f32 %v618, 0.6931472
  %v620 = vlog2.pop %v581
  %v621 = vmul.f32 %v620, 0.6931472
  %v622 = vlog2.pop %v584
  %v623 = vmul.f32 %v622, 0.6931472
  %v624 = vlog2.pop %v587
  %v625 = vmul.f32 %v624, 0.6931472
  %v626 = vlog2.pop %v590
  %v627 = vmul.f32 %v626, 0.6931472
  %v628 = vlog2.pop %v593
  %v629 = vmul.f32 %v628, 0.6931472
  %v630 = vlog2.pop %v596
  %v631 = vmul.f32 %v630, 0.6931472
  %v632 = vlog2.pop %v599
  %v633 = vmul.f32 %v632, 0.6931472
  %v634 = vlog2.pop %v602
  %v635 = vmul.f32 %v634, 0.6931472
  %v636 = vlog2.pop %v605
  %v637 = vmul.f32 %v636, 0.6931472
  %v638 = vadd.f32 %v607, %v464
  %v639 = vadd.f32 %v609, %v467
  %v640 = vadd.f32 %v611, %v470
  %v641 = vadd.f32 %v613, %v473
  %v642 = vadd.f32 %v615, %v476
  %v643 = vadd.f32 %v617, %v479
  %v644 = vadd.f32 %v619, %v482
  %v645 = vadd.f32 %v621, %v485
  %v646 = vadd.f32 %v623, %v488
  %v647 = vadd.f32 %v625, %v491
  %v648 = vadd.f32 %v627, %v494
  %v649 = vadd.f32 %v629, %v497
  %v650 = vadd.f32 %v631, %v500
  %v651 = vadd.f32 %v633, %v503
  %v652 = vadd.f32 %v635, %v506
  %v653 = vadd.f32 %v637, %v509
  %v654 = vsub.f32 %v383, %v638
  %v655 = vsub.f32 %v388, %v639
  %v656 = vsub.f32 %v393, %v640
  %v657 = vsub.f32 %v398, %v641
  %v658 = vsub.f32 %v403, %v642
  %v659 = vsub.f32 %v408, %v643
  %v660 = vsub.f32 %v413, %v644
  %v661 = vsub.f32 %v418, %v645
  %v662 = vsub.f32 %v423, %v646
  %v663 = vsub.f32 %v428, %v647
  %v664 = vsub.f32 %v433, %v648
  %v665 = vsub.f32 %v438, %v649
  %v666 = vsub.f32 %v443, %v650
  %v667 = vsub.f32 %v448, %v651
  %v668 = vsub.f32 %v453, %v652
  %v669 = vsub.f32 %v458, %v653
  %670 = vst.msk [vmem:[%s5] sm:$0xff] %vm461, %v654
  %671 = vst.msk [vmem:[%s5 + $0x8] sm:$0xff] %vm461, %v655
  %672 = vst.msk [vmem:[%s5 + $0x10] sm:$0xff] %vm461, %v656
  %673 = vst.msk [vmem:[%s5 + $0x18] sm:$0xff] %vm461, %v657
  %674 = vst.msk [vmem:[%s5 + $0x20] sm:$0xff] %vm461, %v658
  %675 = vst.msk [vmem:[%s5 + $0x28] sm:$0xff] %vm461, %v659
  %676 = vst.msk [vmem:[%s5 + $0x30] sm:$0xff] %vm461, %v660
  %677 = vst.msk [vmem:[%s5 + $0x38] sm:$0xff] %vm461, %v661
  %678 = vst.msk [vmem:[%s5 + $0x40] sm:$0xff] %vm461, %v662
  %679 = vst.msk [vmem:[%s5 + $0x48] sm:$0xff] %vm461, %v663
  %680 = vst.msk [vmem:[%s5 + $0x50] sm:$0xff] %vm461, %v664
  %681 = vst.msk [vmem:[%s5 + $0x58] sm:$0xff] %vm461, %v665
  %682 = vst.msk [vmem:[%s5 + $0x60] sm:$0xff] %vm461, %v666
  %683 = vst.msk [vmem:[%s5 + $0x68] sm:$0xff] %vm461, %v667
  %684 = vst.msk [vmem:[%s5 + $0x70] sm:$0xff] %vm461, %v668
  %685 = vst.msk [vmem:[%s5 + $0x78] sm:$0xff] %vm461, %v669
  // Predicated region
  $region22: #{tpu_custom_call.1} parent=0 // pred_check
    _
  $region23: #{tpu_custom_call.1} parent=0 // pred_check_branch
    %687 = sbr.rel (0) target = $region25
  $region24: #{tpu_custom_call.1} parent=0 // pred_region
    _
  $region25: #{tpu_custom_call.1} parent=0 // pred_fallthru
    _
  // Predicated region
  $region26: #{tpu_custom_call.1} parent=0 // pred_check
    _
  $region27: #{tpu_custom_call.1} parent=0 // pred_check_branch
    %689 = sbr.rel (0) target = $region29
  $region28: #{tpu_custom_call.1} parent=0 // pred_region
    _
  $region29: #{tpu_custom_call.1} parent=0 // pred_fallthru
    _

</llo_original>
